<compile_context>
chip_gen: v6e
topology: v6e:2x2x1
jax: 0.10.0
libtpu: 0.0.40
codegen_flags: <defaults>
</compile_context>

<pallas_src>
import jax
import jax.numpy as jnp
from jax.experimental import pallas as pl
from jax.experimental.pallas import tpu as pltpu

_HIDDEN = 64
_LANE = 128


def _round_up(n: int, m: int) -> int:
    return ((n + m - 1) // m) * m


def _mlp_kernel(x_ref, w1_ref, b1_ref, w2_ref, b2_ref, w3_ref, b3_ref, o_ref):
    # Layer 1: Linear + ReLU (MXU matmul, f32 accumulate, f32 epilogue).
    h1 = jnp.dot(x_ref[...], w1_ref[...], preferred_element_type=jnp.float32)
    h1 = jnp.maximum(h1 + b1_ref[...], 0.0)
    # Layer 2: Linear + ReLU.
    h2 = jnp.dot(h1.astype(w2_ref.dtype), w2_ref[...],
                 preferred_element_type=jnp.float32)
    h2 = jnp.maximum(h2 + b2_ref[...], 0.0)
    # Layer 3: Linear (logits, no activation). Output tile is lane-dense
    # (padded out-features), so this is an unmasked full-lane store.
    out = jnp.dot(h2.astype(w3_ref.dtype), w3_ref[...],
                  preferred_element_type=jnp.float32)
    o_ref[...] = (out + b3_ref[...]).astype(o_ref.dtype)


def policy_approximator_forward(x, params, *, block_b: int = 256,
                                use_bf16_matmul: bool = False):
    """Fused MLP forward pass.

    x: (B, n_observations) float32
    params: dict with w1 (n_obs,64), b1 (1,64), w2 (64,64), b2 (1,64),
            w3 (64,n_actions), b3 (1,n_actions)
    returns: (B, n_actions) float32 logits
    """
    B, n_obs = x.shape
    n_actions = params["w3"].shape[1]

    # --- Pad to TPU-friendly shapes (zero padding preserves numerics). ---
    n_obs_p = _round_up(max(n_obs, 1), _LANE)      # lane-dense x loads
    n_act_p = _round_up(max(n_actions, 1), _LANE)  # lane-dense output stores

    TB = min(block_b, _round_up(B, 8))             # batch tile (sublane mult.)
    B_p = _round_up(B, TB)

    x_p = jnp.zeros((B_p, n_obs_p), jnp.float32).at[:B, :n_obs].set(x)
    w1_p = jnp.zeros((n_obs_p, _HIDDEN), jnp.float32).at[:n_obs, :].set(
        params["w1"])
    w2 = params["w2"]
    w3_p = jnp.zeros((_HIDDEN, n_act_p), jnp.float32).at[:, :n_actions].set(
        params["w3"])
    b1 = params["b1"]
    b2 = params["b2"]
    b3_p = jnp.zeros((1, n_act_p), jnp.float32).at[:, :n_actions].set(
        params["b3"])

    if use_bf16_matmul:
        # bf16 into the MXU (full rate on v6e/v7x, efficient on v5e); biases,
        # accumulation and the ReLU epilogue stay f32 inside the kernel.
        x_p = x_p.astype(jnp.bfloat16)
        w1_p = w1_p.astype(jnp.bfloat16)
        w2 = w2.astype(jnp.bfloat16)
        w3_p = w3_p.astype(jnp.bfloat16)

    grid = (B_p // TB,)

    # x / output tiles walk the batch; weights & biases are resident in VMEM.
    in_specs = [
        pl.BlockSpec((TB, n_obs_p), lambda i: (i, 0)),
        pl.BlockSpec(w1_p.shape, lambda i: (0, 0)),
        pl.BlockSpec(b1.shape, lambda i: (0, 0)),
        pl.BlockSpec(w2.shape, lambda i: (0, 0)),
        pl.BlockSpec(b2.shape, lambda i: (0, 0)),
        pl.BlockSpec(w3_p.shape, lambda i: (0, 0)),
        pl.BlockSpec(b3_p.shape, lambda i: (0, 0)),
    ]
    out_specs = pl.BlockSpec((TB, n_act_p), lambda i: (i, 0))

    elt = 2 if use_bf16_matmul else 4
    cost = pl.CostEstimate(
        flops=2 * B_p * (n_obs_p * _HIDDEN + _HIDDEN * _HIDDEN
                         + _HIDDEN * n_act_p),
        transcendentals=0,
        bytes_accessed=(x_p.size * elt
                        + (w1_p.size + w2.size + w3_p.size) * elt
                        + (b1.size + b2.size + b3_p.size) * 4
                        + B_p * n_act_p * 4),
    )

    out_p = pl.pallas_call(
        _mlp_kernel,
        out_shape=jax.ShapeDtypeStruct((B_p, n_act_p), jnp.float32),
        grid=grid,
        in_specs=in_specs,
        out_specs=out_specs,
        compiler_params=pltpu.CompilerParams(
            dimension_semantics=("parallel",)),
        cost_estimate=cost,
    )(x_p, w1_p, b1, w2, b2, w3_p, b3_p)

    return out_p[:B, :n_actions]


def init_params(key, n_observations, n_actions, hidden=_HIDDEN):
    """Deterministic init matching the PyTorch module's shapes
    (weights stored transposed: (in, out))."""
    ks = jax.random.split(key, 6)

    def linear(kw, kb, fan_in, fan_out):
        bound = 1.0 / jnp.sqrt(fan_in)
        w = jax.random.uniform(kw, (fan_in, fan_out), jnp.float32, -bound, bound)
        b = jax.random.uniform(kb, (1, fan_out), jnp.float32, -bound, bound)
        return w, b

    w1, b1 = linear(ks[0], ks[1], n_observations, hidden)
    w2, b2 = linear(ks[2], ks[3], hidden, hidden)
    w3, b3 = linear(ks[4], ks[5], hidden, n_actions)
    return {"w1": w1, "b1": b1, "w2": w2, "b2": b2, "w3": w3, "b3": b3}


def _reference_forward(x, p):
    h1 = jnp.maximum(x @ p["w1"] + p["b1"], 0.0)
    h2 = jnp.maximum(h1 @ p["w2"] + p["b2"], 0.0)
    return h2 @ p["w3"] + p["b3"]


if __name__ == "__main__":
    key = jax.random.PRNGKey(0)
    k_param, k_x = jax.random.split(key)

    batch = 8
    n_observations = 16
    n_actions = 4

    params = init_params(k_param, n_observations, n_actions)
    x = jax.random.normal(k_x, (batch, n_observations), jnp.float32)

    # Small inference-style batch (single grid step).
    out = jax.block_until_ready(policy_approximator_forward(x, params))
    ref = _reference_forward(x, params)
    assert out.shape == (batch, n_actions)
    assert jnp.allclose(out, ref, atol=1e-4, rtol=1e-4)

    # Larger, non-multiple batch: exercises the batch-tiled grid (4 steps),
    # batch padding, and resident-weight index maps.
    xb = jax.random.normal(jax.random.PRNGKey(1), (1000, n_observations),
                           jnp.float32)
    outb = jax.block_until_ready(policy_approximator_forward(xb, params))
    refb = _reference_forward(xb, params)
    assert outb.shape == (1000, n_actions)
    assert jnp.allclose(outb, refb, atol=1e-4, rtol=1e-4)

    print("KERNEL_OK")
</pallas_src>

<mosaic_0001>
module attributes {stable_mosaic.version = 11 : i64} {
  func.func @_mlp_kernel(%arg0: i32, %arg1: memref<8x128xf32, #tpu.memory_space<vmem>>, %arg2: memref<128x64xf32, #tpu.memory_space<vmem>>, %arg3: memref<1x64xf32, #tpu.memory_space<vmem>>, %arg4: memref<64x64xf32, #tpu.memory_space<vmem>>, %arg5: memref<1x64xf32, #tpu.memory_space<vmem>>, %arg6: memref<64x128xf32, #tpu.memory_space<vmem>>, %arg7: memref<1x128xf32, #tpu.memory_space<vmem>>, %arg8: memref<8x128xf32, #tpu.memory_space<vmem>>) attributes {dimension_semantics = [#tpu.dimension_semantics<parallel>], iteration_bounds = array<i64: 1>, scalar_prefetch = 0 : i64, scratch_operands = 0 : i64, tpu.core_type = #tpu.core_type<tc>, window_params = [{transform_indices = @transform_0, window_bounds = array<i64: 8, 128>}, {pipeline_mode = #tpu.pipeline_mode<synchronous>, transform_indices = @transform_1, window_bounds = array<i64: 128, 64>}, {pipeline_mode = #tpu.pipeline_mode<synchronous>, transform_indices = @transform_2, window_bounds = array<i64: 1, 64>}, {pipeline_mode = #tpu.pipeline_mode<synchronous>, transform_indices = @transform_3, window_bounds = array<i64: 64, 64>}, {pipeline_mode = #tpu.pipeline_mode<synchronous>, transform_indices = @transform_4, window_bounds = array<i64: 1, 64>}, {pipeline_mode = #tpu.pipeline_mode<synchronous>, transform_indices = @transform_5, window_bounds = array<i64: 64, 128>}, {pipeline_mode = #tpu.pipeline_mode<synchronous>, transform_indices = @transform_6, window_bounds = array<i64: 1, 128>}, {transform_indices = @transform_7, window_bounds = array<i64: 8, 128>}]} {
    %c0 = arith.constant 0 : index
    %c0_0 = arith.constant 0 : index
    %0 = vector.load %arg1[%c0, %c0_0] : memref<8x128xf32, #tpu.memory_space<vmem>>, vector<8x128xf32>
    %c0_1 = arith.constant 0 : index
    %c0_2 = arith.constant 0 : index
    %1 = vector.load %arg2[%c0_1, %c0_2] : memref<128x64xf32, #tpu.memory_space<vmem>>, vector<128x64xf32>
    %cst = arith.constant dense<0.000000e+00> : vector<8x64xf32>
    %2 = tpu.matmul %0, %1, %cst {dimension_numbers = #tpu.dot_dimension_numbers<[1], [0], [0], [1], [0, 0, 1, 1], [], []>} : vector<8x128xf32>, vector<128x64xf32>, vector<8x64xf32> -> vector<8x64xf32>
    %c0_3 = arith.constant 0 : index
    %c0_4 = arith.constant 0 : index
    %3 = vector.load %arg3[%c0_3, %c0_4] : memref<1x64xf32, #tpu.memory_space<vmem>>, vector<1x64xf32>
    %4 = vector.broadcast %3 : vector<1x64xf32> to vector<8x64xf32>
    %5 = arith.addf %2, %4 : vector<8x64xf32>
    %cst_5 = arith.constant 0.000000e+00 : f32
    %6 = vector.broadcast %cst_5 : f32 to vector<8x64xf32>
    %7 = arith.maximumf %5, %6 : vector<8x64xf32>
    %c0_6 = arith.constant 0 : index
    %c0_7 = arith.constant 0 : index
    %8 = vector.load %arg4[%c0_6, %c0_7] : memref<64x64xf32, #tpu.memory_space<vmem>>, vector<64x64xf32>
    %cst_8 = arith.constant dense<0.000000e+00> : vector<8x64xf32>
    %9 = tpu.matmul %7, %8, %cst_8 {dimension_numbers = #tpu.dot_dimension_numbers<[1], [0], [0], [1], [0, 0, 1, 1], [], []>} : vector<8x64xf32>, vector<64x64xf32>, vector<8x64xf32> -> vector<8x64xf32>
    %c0_9 = arith.constant 0 : index
    %c0_10 = arith.constant 0 : index
    %10 = vector.load %arg5[%c0_9, %c0_10] : memref<1x64xf32, #tpu.memory_space<vmem>>, vector<1x64xf32>
    %11 = vector.broadcast %10 : vector<1x64xf32> to vector<8x64xf32>
    %12 = arith.addf %9, %11 : vector<8x64xf32>
    %cst_11 = arith.constant 0.000000e+00 : f32
    %13 = vector.broadcast %cst_11 : f32 to vector<8x64xf32>
    %14 = arith.maximumf %12, %13 : vector<8x64xf32>
    %c0_12 = arith.constant 0 : index
    %c0_13 = arith.constant 0 : index
    %15 = vector.load %arg6[%c0_12, %c0_13] : memref<64x128xf32, #tpu.memory_space<vmem>>, vector<64x128xf32>
    %cst_14 = arith.constant dense<0.000000e+00> : vector<8x128xf32>
    %16 = tpu.matmul %14, %15, %cst_14 {dimension_numbers = #tpu.dot_dimension_numbers<[1], [0], [0], [1], [0, 0, 1, 1], [], []>} : vector<8x64xf32>, vector<64x128xf32>, vector<8x128xf32> -> vector<8x128xf32>
    %c0_15 = arith.constant 0 : index
    %c0_16 = arith.constant 0 : index
    %17 = vector.load %arg7[%c0_15, %c0_16] : memref<1x128xf32, #tpu.memory_space<vmem>>, vector<1x128xf32>
    %18 = vector.broadcast %17 : vector<1x128xf32> to vector<8x128xf32>
    %19 = arith.addf %16, %18 : vector<8x128xf32>
    %c0_17 = arith.constant 0 : index
    %c0_18 = arith.constant 0 : index
    %20 = vector.load %arg8[%c0_17, %c0_18] : memref<8x128xf32, #tpu.memory_space<vmem>>, vector<8x128xf32>
    tpu.vector_store %arg8[%c0_17, %c0_18], %19 {strides = array<i32>} : memref<8x128xf32, #tpu.memory_space<vmem>>, vector<8x128xf32>,
    return
  }
  func.func @transform_0(%arg0: i32) -> (i32, i32) {
    %c0_i32 = arith.constant 0 : i32
    %c0_i32_0 = arith.constant 0 : i32
    return %arg0, %c0_i32 : i32, i32
  }
  func.func @transform_1(%arg0: i32) -> (i32, i32) {
    %c0_i32 = arith.constant 0 : i32
    %c0_i32_0 = arith.constant 0 : i32
    %c0_i32_1 = arith.constant 0 : i32
    return %c0_i32, %c0_i32_0 : i32, i32
  }
  func.func @transform_2(%arg0: i32) -> (i32, i32) {
    %c0_i32 = arith.constant 0 : i32
    %c0_i32_0 = arith.constant 0 : i32
    %c0_i32_1 = arith.constant 0 : i32
    return %c0_i32, %c0_i32_0 : i32, i32
  }
  func.func @transform_3(%arg0: i32) -> (i32, i32) {
    %c0_i32 = arith.constant 0 : i32
    %c0_i32_0 = arith.constant 0 : i32
    %c0_i32_1 = arith.constant 0 : i32
    return %c0_i32, %c0_i32_0 : i32, i32
  }
  func.func @transform_4(%arg0: i32) -> (i32, i32) {
    %c0_i32 = arith.constant 0 : i32
    %c0_i32_0 = arith.constant 0 : i32
    %c0_i32_1 = arith.constant 0 : i32
    return %c0_i32, %c0_i32_0 : i32, i32
  }
  func.func @transform_5(%arg0: i32) -> (i32, i32) {
    %c0_i32 = arith.constant 0 : i32
    %c0_i32_0 = arith.constant 0 : i32
    %c0_i32_1 = arith.constant 0 : i32
    return %c0_i32, %c0_i32_0 : i32, i32
  }
  func.func @transform_6(%arg0: i32) -> (i32, i32) {
    %c0_i32 = arith.constant 0 : i32
    %c0_i32_0 = arith.constant 0 : i32
    %c0_i32_1 = arith.constant 0 : i32
    return %c0_i32, %c0_i32_0 : i32, i32
  }
  func.func @transform_7(%arg0: i32) -> (i32, i32) {
    %c0_i32 = arith.constant 0 : i32
    %c0_i32_0 = arith.constant 0 : i32
    return %arg0, %c0_i32 : i32, i32
  }
}

</mosaic_0001>

<llo_original>
// kernel: tpu_custom_call.1
$region0: #{tpu_custom_call.1}
  #allocation0 [shape = 'u32[]', space=smem, size = 0x4, offset = 0x4, fixed_abs, tag = 'smem constant byte address 0x4 - core index']
  #allocation1 [shape = 'u32[144,128]{1,0:T(1,128)}', space=vmem, size = 0x12000, scoped, tag = 'internal scratch']
  %s0 = inlined_call_operand.vmem [shape: f32[8,128], index: 0, kind: input, shape index: {}]
  %s1 = inlined_call_operand.vmem [shape: f32[128,64], index: 1, kind: input, shape index: {}]
  %s2 = inlined_call_operand.vmem [shape: f32[1,64], index: 2, kind: input, shape index: {}]
  %s3 = inlined_call_operand.vmem [shape: f32[64,64], index: 3, kind: input, shape index: {}]
  %s4 = inlined_call_operand.vmem [shape: f32[1,64], index: 4, kind: input, shape index: {}]
  %s5 = inlined_call_operand.vmem [shape: f32[64,128], index: 5, kind: input, shape index: {}]
  %s6 = inlined_call_operand.vmem [shape: f32[1,128], index: 6, kind: input, shape index: {}]
  %s7 = inlined_call_operand.hbm [shape: f32[8,128], index: 7, kind: output, shape index: {}]
  %s8 = sld [smem:[#allocation0]]
  $region38: #{tpu_custom_call.1} parent=0
    _
  %s10 = ssub.s32 1, %s8
  %s11 = scalar_select 0, %s10, %s8
  $region1: #{tpu_custom_call.1} parent=0
    #allocation2 [shape = 'u8[4096]{0}', space=vmem, size = 0x1000, scoped, tag = 'output window, operand 0, single buffered']
    #allocation3 [shape = 's32[1]{0}', space=sflag, size = 0x4, scoped, tag = 'scoped memory for tpu_custom_call.1']
    %12 = vsyncpa [#allocation3], 0
    // Predicated region
    $region2: #{tpu_custom_call.1} parent=1 // pred_check
      _
    $region3: #{tpu_custom_call.1} parent=1 // pred_check_branch
      %14 = sbr.rel (0) target = $region5
    $region4: #{tpu_custom_call.1} parent=1 // pred_region
      _
    $region5: #{tpu_custom_call.1} parent=1 // pred_fallthru
      _
    // Predicated region
    $region6: #{tpu_custom_call.1} parent=1 // pred_check
      _
    $region7: #{tpu_custom_call.1} parent=1 // pred_check_branch
      %16 = sbr.rel (0) target = $region9
    $region8: #{tpu_custom_call.1} parent=1 // pred_region
      _
    $region9: #{tpu_custom_call.1} parent=1 // pred_fallthru
      _
    // Predicated region
    $region10: #{tpu_custom_call.1} parent=1 // pred_check
      _
    $region11: #{tpu_custom_call.1} parent=1 // pred_check_branch
      %18 = sbr.rel (0) target = $region13
    $region12: #{tpu_custom_call.1} parent=1 // pred_region
      _
    $region13: #{tpu_custom_call.1} parent=1 // pred_fallthru
      _
    // Predicated region
    $region14: #{tpu_custom_call.1} parent=1 // pred_check
      _
    $region15: #{tpu_custom_call.1} parent=1 // pred_check_branch
      %20 = sbr.rel (0) target = $region17
    $region16: #{tpu_custom_call.1} parent=1 // pred_region
      _
    $region17: #{tpu_custom_call.1} parent=1 // pred_fallthru
      _
    // Predicated region
    $region18: #{tpu_custom_call.1} parent=1 // pred_check
      _
    $region19: #{tpu_custom_call.1} parent=1 // pred_check_branch
      %22 = sbr.rel (0) target = $region21
    $region20: #{tpu_custom_call.1} parent=1 // pred_region
      _
    $region21: #{tpu_custom_call.1} parent=1 // pred_fallthru
      _
    // Predicated region
    $region22: #{tpu_custom_call.1} parent=1 // pred_check
      _
    $region23: #{tpu_custom_call.1} parent=1 // pred_check_branch
      %24 = sbr.rel (0) target = $region25
    $region24: #{tpu_custom_call.1} parent=1 // pred_region
      _
    $region25: #{tpu_custom_call.1} parent=1 // pred_fallthru
      _
    // Predicated region
    $region26: #{tpu_custom_call.1} parent=1 // pred_check
      _
    $region27: #{tpu_custom_call.1} parent=1 // pred_check_branch
      %26 = sbr.rel (0) target = $region29
    $region28: #{tpu_custom_call.1} parent=1 // pred_region
      _
    $region29: #{tpu_custom_call.1} parent=1 // pred_fallthru
      _
    %v27 = vld [vmem:[%s0] sm:$0xff]
    %v28 = vld [vmem:[%s1] sm:$0xff]
    %v29 = vld [vmem:[%s1 + $0x8] sm:$0xff]
    %v30 = vld [vmem:[%s1 + $0x10] sm:$0xff]
    %v31 = vld [vmem:[%s1 + $0x18] sm:$0xff]
    %v32 = vld [vmem:[%s1 + $0x20] sm:$0xff]
    %v33 = vld [vmem:[%s1 + $0x28] sm:$0xff]
    %v34 = vld [vmem:[%s1 + $0x30] sm:$0xff]
    %v35 = vld [vmem:[%s1 + $0x38] sm:$0xff]
    %v36 = vld [vmem:[%s1 + $0x40] sm:$0xff]
    %v37 = vld [vmem:[%s1 + $0x48] sm:$0xff]
    %v38 = vld [vmem:[%s1 + $0x50] sm:$0xff]
    %v39 = vld [vmem:[%s1 + $0x58] sm:$0xff]
    %v40 = vld [vmem:[%s1 + $0x60] sm:$0xff]
    %v41 = vld [vmem:[%s1 + $0x68] sm:$0xff]
    %v42 = vld [vmem:[%s1 + $0x70] sm:$0xff]
    %v43 = vld [vmem:[%s1 + $0x78] sm:$0xff]
    %v44 = vld [vmem:[%s2] sm:$0x1]
    %v46 = vlaneseq
    %v47 = vshrl.u32 %v46, 7
    %v48 = vsub.s32 0, %v47
    %v49 = vrot.slane %v44, %v48
    %51 = vmatprep.subr.mxu0 0.0
    %52 = vmatpush1.msra.mxu0 %v43
    %53 = vmatprep.subr.mxu0 0.0
    %54 = vmatpush1.msra.mxu0 %v42
    %55 = vmatprep.subr.mxu0 0.0
    %56 = vmatpush1.msra.mxu0 %v41
    %57 = vmatprep.subr.mxu0 0.0
    %58 = vmatpush1.msra.mxu0 %v40
    %59 = vmatprep.subr.mxu0 0.0
    %60 = vmatpush1.msra.mxu0 %v39
    %61 = vmatprep.subr.mxu0 0.0
    %62 = vmatpush1.msra.mxu0 %v38
    %63 = vmatprep.subr.mxu0 0.0
    %64 = vmatpush1.msra.mxu0 %v37
    %65 = vmatprep.subr.mxu0 0.0
    %66 = vmatpush1.msra.mxu0 %v36
    %67 = vmatprep.subr.mxu0 0.0
    %68 = vmatpush1.msra.mxu0 %v35
    %69 = vmatprep.subr.mxu0 0.0
    %70 = vmatpush1.msra.mxu0 %v34
    %71 = vmatprep.subr.mxu0 0.0
    %72 = vmatpush1.msra.mxu0 %v33
    %73 = vmatprep.subr.mxu0 0.0
    %74 = vmatpush1.msra.mxu0 %v32
    %75 = vmatprep.subr.mxu0 0.0
    %76 = vmatpush1.msra.mxu0 %v31
    %77 = vmatprep.subr.mxu0 0.0
    %78 = vmatpush1.msra.mxu0 %v30
    %79 = vmatprep.subr.mxu0 0.0
    %80 = vmatpush1.msra.mxu0 %v29
    %81 = vmatprep.subr.mxu0 0.0
    %82 = vmatpush1.msra.mxu0 %v28
    %83 = vmatprep.subr.mxu0 0.0
    %84 = vmatpush2.msra.mxu0 0.0
    %85 = vmatprep.subr.mxu0 0.0
    %86 = vmatpush2.msra.mxu0 0.0
    %87 = vmatprep.subr.mxu0 0.0
    %88 = vmatpush2.msra.mxu0 0.0
    %89 = vmatprep.subr.mxu0 0.0
    %90 = vmatpush2.msra.mxu0 0.0
    %91 = vmatprep.subr.mxu0 0.0
    %92 = vmatpush2.msra.mxu0 0.0
    %93 = vmatprep.subr.mxu0 0.0
    %94 = vmatpush2.msra.mxu0 0.0
    %95 = vmatprep.subr.mxu0 0.0
    %96 = vmatpush2.msra.mxu0 0.0
    %97 = vmatprep.subr.mxu0 0.0
    %98 = vmatpush2.msra.mxu0 0.0
    %99 = vmatprep.subr.mxu0 0.0
    %100 = vmatpush2.msra.mxu0 0.0
    %101 = vmatprep.subr.mxu0 0.0
    %102 = vmatpush2.msra.mxu0 0.0
    %103 = vmatprep.subr.mxu0 0.0
    %104 = vmatpush2.msra.mxu0 0.0
    %105 = vmatprep.subr.mxu0 0.0
    %106 = vmatpush2.msra.mxu0 0.0
    %107 = vmatprep.subr.mxu0 0.0
    %108 = vmatpush2.msra.mxu0 0.0
    %109 = vmatprep.subr.mxu0 0.0
    %110 = vmatpush2.msra.mxu0 0.0
    %111 = vmatprep.subr.mxu0 0.0
    %112 = vmatpush2.msra.mxu0 0.0
    %113 = vmatprep.subr.mxu0 0.0
    %114 = vmatpush2.msra.mxu0 0.0
    %115 = vmatprep.mubr.f32.mxu0 0.0
    %116 = vmatmul.mubr.f32.gmra.mxu0 %v27
    %v117 = vpop.f32.mrf.mxu0
    %v118 = vadd.f32 %v49, %v117
    %v119 = vpop.f32.mrf.mxu0
    %120 = vdwg.mxu0
    %v121 = vmax.f32 %v118, 0.0
    %v122 = vld [vmem:[%s3] sm:$0xff]
    %v123 = vld [vmem:[%s3 + $0x8] sm:$0xff]
    %v124 = vld [vmem:[%s3 + $0x10] sm:$0xff]
    %v125 = vld [vmem:[%s3 + $0x18] sm:$0xff]
    %v126 = vld [vmem:[%s3 + $0x20] sm:$0xff]
    %v127 = vld [vmem:[%s3 + $0x28] sm:$0xff]
    %v128 = vld [vmem:[%s3 + $0x30] sm:$0xff]
    %v129 = vld [vmem:[%s3 + $0x38] sm:$0xff]
    %v130 = vld [vmem:[%s4] sm:$0x1]
    %v132 = vlaneseq
    %v133 = vshrl.u32 %v132, 7
    %v134 = vsub.s32 0, %v133
    %v135 = vrot.slane %v130, %v134
    %vm137 = vcmask 523264
    %v139 = vsel %vm137, %v121, 0
    %141 = vmatprep.subr.mxu0 0.0
    %142 = vmatpush1.msra.mxu0 0.0
    %143 = vmatprep.subr.mxu0 0.0
    %144 = vmatpush1.msra.mxu0 0.0
    %145 = vmatprep.subr.mxu0 0.0
    %146 = vmatpush1.msra.mxu0 0.0
    %147 = vmatprep.subr.mxu0 0.0
    %148 = vmatpush1.msra.mxu0 0.0
    %149 = vmatprep.subr.mxu0 0.0
    %150 = vmatpush1.msra.mxu0 0.0
    %151 = vmatprep.subr.mxu0 0.0
    %152 = vmatpush1.msra.mxu0 0.0
    %153 = vmatprep.subr.mxu0 0.0
    %154 = vmatpush1.msra.mxu0 0.0
    %155 = vmatprep.subr.mxu0 0.0
    %156 = vmatpush1.msra.mxu0 0.0
    %157 = vmatprep.subr.mxu0 0.0
    %158 = vmatpush1.msra.mxu0 %v129
    %159 = vmatprep.subr.mxu0 0.0
    %160 = vmatpush1.msra.mxu0 %v128
    %161 = vmatprep.subr.mxu0 0.0
    %162 = vmatpush1.msra.mxu0 %v127
    %163 = vmatprep.subr.mxu0 0.0
    %164 = vmatpush1.msra.mxu0 %v126
    %165 = vmatprep.subr.mxu0 0.0
    %166 = vmatpush1.msra.mxu0 %v125
    %167 = vmatprep.subr.mxu0 0.0
    %168 = vmatpush1.msra.mxu0 %v124
    %169 = vmatprep.subr.mxu0 0.0
    %170 = vmatpush1.msra.mxu0 %v123
    %171 = vmatprep.subr.mxu0 0.0
    %172 = vmatpush1.msra.mxu0 %v122
    %173 = vmatprep.subr.mxu0 0.0
    %174 = vmatpush2.msra.mxu0 0.0
    %175 = vmatprep.subr.mxu0 0.0
    %176 = vmatpush2.msra.mxu0 0.0
    %177 = vmatprep.subr.mxu0 0.0
    %178 = vmatpush2.msra.mxu0 0.0
    %179 = vmatprep.subr.mxu0 0.0
    %180 = vmatpush2.msra.mxu0 0.0
    %181 = vmatprep.subr.mxu0 0.0
    %182 = vmatpush2.msra.mxu0 0.0
    %183 = vmatprep.subr.mxu0 0.0
    %184 = vmatpush2.msra.mxu0 0.0
    %185 = vmatprep.subr.mxu0 0.0
    %186 = vmatpush2.msra.mxu0 0.0
    %187 = vmatprep.subr.mxu0 0.0
    %188 = vmatpush2.msra.mxu0 0.0
    %189 = vmatprep.subr.mxu0 0.0
    %190 = vmatpush2.msra.mxu0 0.0
    %191 = vmatprep.subr.mxu0 0.0
    %192 = vmatpush2.msra.mxu0 0.0
    %193 = vmatprep.subr.mxu0 0.0
    %194 = vmatpush2.msra.mxu0 0.0
    %195 = vmatprep.subr.mxu0 0.0
    %196 = vmatpush2.msra.mxu0 0.0
    %197 = vmatprep.subr.mxu0 0.0
    %198 = vmatpush2.msra.mxu0 0.0
    %199 = vmatprep.subr.mxu0 0.0
    %200 = vmatpush2.msra.mxu0 0.0
    %201 = vmatprep.subr.mxu0 0.0
    %202 = vmatpush2.msra.mxu0 0.0
    %203 = vmatprep.subr.mxu0 0.0
    %204 = vmatpush2.msra.mxu0 0.0
    %205 = vmatprep.mubr.f32.mxu0 0.0
    %206 = vmatmul.mubr.f32.gmra.mxu0 %v139
    %v207 = vpop.f32.mrf.mxu0
    %v208 = vadd.f32 %v135, %v207
    %v209 = vpop.f32.mrf.mxu0
    %210 = vdwg.mxu0
    %v211 = vmax.f32 %v208, 0.0
    %v212 = vld [vmem:[%s5] sm:$0xff]
    %v213 = vld [vmem:[%s5 + $0x8] sm:$0xff]
    %v214 = vld [vmem:[%s5 + $0x10] sm:$0xff]
    %v215 = vld [vmem:[%s5 + $0x18] sm:$0xff]
    %v216 = vld [vmem:[%s5 + $0x20] sm:$0xff]
    %v217 = vld [vmem:[%s5 + $0x28] sm:$0xff]
    %v218 = vld [vmem:[%s5 + $0x30] sm:$0xff]
    %v219 = vld [vmem:[%s5 + $0x38] sm:$0xff]
    %v220 = vld [vmem:[%s6] sm:$0x1]
    %v222 = vlaneseq
    %v223 = vshrl.u32 %v222, 7
    %v224 = vsub.s32 0, %v223
    %v225 = vrot.slane %v220, %v224
    %v228 = vsel %vm137, %v211, 0
    %230 = vmatprep.subr.mxu0 0.0
    %231 = vmatpush1.msra.mxu0 0.0
    %232 = vmatprep.subr.mxu0 0.0
    %233 = vmatpush1.msra.mxu0 0.0
    %234 = vmatprep.subr.mxu0 0.0
    %235 = vmatpush1.msra.mxu0 0.0
    %236 = vmatprep.subr.mxu0 0.0
    %237 = vmatpush1.msra.mxu0 0.0
    %238 = vmatprep.subr.mxu0 0.0
    %239 = vmatpush1.msra.mxu0 0.0
    %240 = vmatprep.subr.mxu0 0.0
    %241 = vmatpush1.msra.mxu0 0.0
    %242 = vmatprep.subr.mxu0 0.0
    %243 = vmatpush1.msra.mxu0 0.0
    %244 = vmatprep.subr.mxu0 0.0
    %245 = vmatpush1.msra.mxu0 0.0
    %246 = vmatprep.subr.mxu0 0.0
    %247 = vmatpush1.msra.mxu0 %v219
    %248 = vmatprep.subr.mxu0 0.0
    %249 = vmatpush1.msra.mxu0 %v218
    %250 = vmatprep.subr.mxu0 0.0
    %251 = vmatpush1.msra.mxu0 %v217
    %252 = vmatprep.subr.mxu0 0.0
    %253 = vmatpush1.msra.mxu0 %v216
    %254 = vmatprep.subr.mxu0 0.0
    %255 = vmatpush1.msra.mxu0 %v215
    %256 = vmatprep.subr.mxu0 0.0
    %257 = vmatpush1.msra.mxu0 %v214
    %258 = vmatprep.subr.mxu0 0.0
    %259 = vmatpush1.msra.mxu0 %v213
    %260 = vmatprep.subr.mxu0 0.0
    %261 = vmatpush1.msra.mxu0 %v212
    %262 = vmatprep.subr.mxu0 0.0
    %263 = vmatpush2.msra.mxu0 0.0
    %264 = vmatprep.subr.mxu0 0.0
    %265 = vmatpush2.msra.mxu0 0.0
    %266 = vmatprep.subr.mxu0 0.0
    %267 = vmatpush2.msra.mxu0 0.0
    %268 = vmatprep.subr.mxu0 0.0
    %269 = vmatpush2.msra.mxu0 0.0
    %270 = vmatprep.subr.mxu0 0.0
    %271 = vmatpush2.msra.mxu0 0.0
    %272 = vmatprep.subr.mxu0 0.0
    %273 = vmatpush2.msra.mxu0 0.0
    %274 = vmatprep.subr.mxu0 0.0
    %275 = vmatpush2.msra.mxu0 0.0
    %276 = vmatprep.subr.mxu0 0.0
    %277 = vmatpush2.msra.mxu0 0.0
    %278 = vmatprep.subr.mxu0 0.0
    %279 = vmatpush2.msra.mxu0 0.0
    %280 = vmatprep.subr.mxu0 0.0
    %281 = vmatpush2.msra.mxu0 0.0
    %282 = vmatprep.subr.mxu0 0.0
    %283 = vmatpush2.msra.mxu0 0.0
    %284 = vmatprep.subr.mxu0 0.0
    %285 = vmatpush2.msra.mxu0 0.0
    %286 = vmatprep.subr.mxu0 0.0
    %287 = vmatpush2.msra.mxu0 0.0
    %288 = vmatprep.subr.mxu0 0.0
    %289 = vmatpush2.msra.mxu0 0.0
    %290 = vmatprep.subr.mxu0 0.0
    %291 = vmatpush2.msra.mxu0 0.0
    %292 = vmatprep.subr.mxu0 0.0
    %293 = vmatpush2.msra.mxu0 0.0
    %294 = vmatprep.mubr.f32.mxu0 0.0
    %295 = vmatmul.mubr.f32.gmra.mxu0 %v228
    %v296 = vpop.f32.mrf.mxu0
    %v297 = vadd.f32 %v225, %v296
    %v298 = vpop.f32.mrf.mxu0
    %299 = vdwg.mxu0
    %300 = vst [vmem:[#allocation2] sm:$0xff] %v297
    // Predicated region
    $region30: #{tpu_custom_call.1} parent=1 // pred_check
      _
    $region31: #{tpu_custom_call.1} parent=1 // pred_check_branch
      %302 = sbr.rel (0) target = $region33
    $region32: #{tpu_custom_call.1} parent=1 // pred_region
      %s304 = ssub.s32 128, 128
      %305 = vsyncadd [#allocation3], %s304
      %s307 = sshll.u32 [#allocation2], 4
      %s308 = int_to_ptr.vmem [resolvable:$true] %s307
      %310 = dma.vmem_to_hbm [thread:$0]  %s308, 128, %s7, [#allocation3]
    $region33: #{tpu_custom_call.1} parent=1 // pred_fallthru
      _
    // Predicated region
    $region34: #{tpu_custom_call.1} parent=1 // pred_check
      _
    $region35: #{tpu_custom_call.1} parent=1 // pred_check_branch
      %312 = sbr.rel (0) target = $region37
    $region36: #{tpu_custom_call.1} parent=1 // pred_region
      %313 = dma.done [#allocation3], 128
    $region37: #{tpu_custom_call.1} parent=1 // pred_fallthru
      _
    %314 = vsyncpa [#allocation3], 1

</llo_original>
